<compile_context>
chip_gen: v5e
topology: v5e:2x2
jax: 0.10.0
libtpu: 0.0.40
codegen_flags: <defaults>
</compile_context>

<pallas_src>
import jax
import jax.numpy as jnp
from jax.experimental import pallas as pl
from jax.experimental.pallas import tpu as pltpu  # noqa: F401  (TPU backend)


def _gather_kernel(codes_ref, task_ref, out_ref):
    """codes_ref: (B, 1) int32 raw expert ids (clamped in-kernel).
       task_ref : (E, D) expert table, fully resident in VMEM (~12 KiB).
       out_ref  : (B, D) gathered rows, written with one full-block store."""
    E, D = task_ref.shape

    codes = jnp.clip(codes_ref[...], 0, E - 1)          # clamp in-kernel (free slots)
    table = task_ref[...]                               # (E, D)

    acc = jnp.zeros(out_ref.shape, jnp.float32)
    # E is small and static -> unrolled compare/select on the VPU.
    for e in range(E):
        sel = (codes == e).astype(jnp.float32)           # (B, 1)
        acc = acc + sel * table[e][None, :]              # (B,1)*(1,D) -> (B,D)

    out_ref[...] = acc.astype(out_ref.dtype)             # single unmasked lane-dense store


def moe_task_embeds(task_embs: jax.Array, edit_code=None, batch_size=None):
    """Pallas implementation of the MoE routing step of MoE.forward.

    task_embs : (E, 1, 1, D) float array (the nn.Parameter).
    edit_code : optional (B,) int array of expert indices. If None, expert 0
                is used for every sample (B = batch_size).
    returns   : (B, 1, 1, D) stacked task embeddings.
    """
    E, one_a, one_b, D = task_embs.shape
    assert one_a == 1 and one_b == 1

    if edit_code is None:
        # Pure broadcast of expert 0 — no kernel launch / DMA needed.
        assert batch_size is not None
        return jnp.broadcast_to(task_embs[0:1], (batch_size, 1, 1, D))

    # Raw ids go straight into the kernel (clamp happens in-kernel).
    codes_2d = edit_code.astype(jnp.int32).reshape(-1, 1)   # (B, 1)
    B = codes_2d.shape[0]

    table_2d = task_embs.reshape(E, D)  # lane-dense layout, D = k*128

    out_2d = pl.pallas_call(
        _gather_kernel,
        out_shape=jax.ShapeDtypeStruct((B, D), task_embs.dtype),
        # Empty grid: single invocation, full-array blocks (block_shape equals
        # full array dims, so the (8,128) rule is not triggered).
        in_specs=[
            pl.BlockSpec((B, 1), lambda: (0, 0)),   # expert ids
            pl.BlockSpec((E, D), lambda: (0, 0)),   # full expert table in VMEM
        ],
        out_specs=pl.BlockSpec((B, D), lambda: (0, 0)),
        cost_estimate=pl.CostEstimate(
            flops=2 * B * E * D,                    # E-way select/accumulate
            transcendentals=0,
            bytes_accessed=(E * D + B * D) * 4 + B * 4,
        ),
    )(codes_2d, table_2d)

    return out_2d.reshape(B, 1, 1, D)


class MoEPallas:
    """Minimal JAX/Pallas analogue of the MoE module's own forward compute."""

    def __init__(self, expert_num: int, dim: int = 768, key=None):
        if key is None:
            key = jax.random.PRNGKey(0)
        # Deterministic init, same shape as torch.randn(expert_num, 1, 1, 768).
        self.task_embs = jax.random.normal(key, (expert_num, 1, 1, dim), jnp.float32)

    def forward(self, concatenated_noisy_latents, timesteps, encoder_hidden_states,
                reference_image_embeds=None, edit_code=None):
        if edit_code is None:
            batch_size = reference_image_embeds.shape[0]
            task_embeds = moe_task_embeds(self.task_embs, None, batch_size)
        else:
            task_embeds = moe_task_embeds(self.task_embs, edit_code)
        added_cond_kwargs = {"task_embeds": task_embeds}
        if reference_image_embeds is not None:
            added_cond_kwargs["image_embeds"] = reference_image_embeds
        # TODO(synk): self.unet(concatenated_noisy_latents, timesteps, ...) is an
        # external diffusers UNet submodule; its forward is not reproducible here.
        return added_cond_kwargs


if __name__ == "__main__":
    key = jax.random.PRNGKey(0)
    k_task, k_lat, k_enc, k_img = jax.random.split(key, 4)

    expert_num = 4
    dim = 768          # cross-attention dim (768 in the reference module)
    B = 2
    num_tokens = 16

    moe = MoEPallas(expert_num, dim, key=k_task)

    # Small synthetic inputs consistent with the forward signature.
    concatenated_noisy_latents = jax.random.normal(k_lat, (B, 8, 16, 16), jnp.float32)
    timesteps = jnp.array([10, 500], dtype=jnp.int32)
    encoder_hidden_states = jax.random.normal(k_enc, (B, 77, dim), jnp.float32)
    reference_image_embeds = jax.random.normal(k_img, (B, num_tokens, dim), jnp.float32)
    edit_code = jnp.array([2, 0], dtype=jnp.int32)

    # Branch with explicit edit codes (runs the Pallas gather kernel).
    out = moe.forward(concatenated_noisy_latents, timesteps, encoder_hidden_states,
                      reference_image_embeds=reference_image_embeds,
                      edit_code=edit_code)
    task_embeds = jax.block_until_ready(out["task_embeds"])
    ref = jnp.take(moe.task_embs, edit_code, axis=0)  # torch.stack([task_embs[e] ...], 0)
    assert task_embeds.shape == (B, 1, 1, dim)
    assert jnp.allclose(task_embeds, ref)

    # Branch with edit_code=None (expert 0 for every sample — pure broadcast,
    # no kernel launch).
    out0 = moe.forward(concatenated_noisy_latents, timesteps, encoder_hidden_states,
                       reference_image_embeds=reference_image_embeds,
                       edit_code=None)
    task_embeds0 = jax.block_until_ready(out0["task_embeds"])
    ref0 = jnp.broadcast_to(moe.task_embs[0:1], (B, 1, 1, dim))
    assert jnp.allclose(task_embeds0, ref0)

    print("KERNEL_OK")
</pallas_src>

<mosaic_0001>
module attributes {stable_mosaic.version = 11 : i64} {
  func.func @_gather_kernel(%arg0: memref<2x1xi32, #tpu.memory_space<vmem>>, %arg1: memref<4x768xf32, #tpu.memory_space<vmem>>, %arg2: memref<2x768xf32, #tpu.memory_space<vmem>>) attributes {dimension_semantics = [], scalar_prefetch = 0 : i64, scratch_operands = 0 : i64, tpu.core_type = #tpu.core_type<tc>} {
    %c0 = arith.constant 0 : index
    %c0_0 = arith.constant 0 : index
    %0 = vector.load %arg0[%c0, %c0_0] : memref<2x1xi32, #tpu.memory_space<vmem>>, vector<2x1xi32>
    %c0_i32 = arith.constant 0 : i32
    %c3_i32 = arith.constant 3 : i32
    %1 = vector.broadcast %c0_i32 : i32 to vector<2x1xi32>
    %2 = arith.maxsi %1, %0 : vector<2x1xi32>
    %3 = vector.broadcast %c3_i32 : i32 to vector<2x1xi32>
    %4 = arith.minsi %3, %2 : vector<2x1xi32>
    %c0_1 = arith.constant 0 : index
    %c0_2 = arith.constant 0 : index
    %5 = vector.load %arg1[%c0_1, %c0_2] : memref<4x768xf32, #tpu.memory_space<vmem>>, vector<4x768xf32>
    %cst = arith.constant 0.000000e+00 : f32
    %6 = vector.broadcast %cst : f32 to vector<2x768xf32>
    %c0_i32_3 = arith.constant 0 : i32
    %7 = vector.broadcast %c0_i32_3 : i32 to vector<2x1xi32>
    %8 = arith.cmpi eq, %4, %7 : vector<2x1xi32>
    %9 = arith.extui %8 : vector<2x1xi1> to vector<2x1xi32>
    %10 = arith.sitofp %9 : vector<2x1xi32> to vector<2x1xf32>
    %11 = vector.extract_strided_slice %5 {offsets = [0, 0], sizes = [1, 768], strides = [1, 1]} : vector<4x768xf32> to vector<1x768xf32>
    %12 = vector.shape_cast %11 : vector<1x768xf32> to vector<768xf32>
    %13 = vector.shape_cast %12 : vector<768xf32> to vector<1x768xf32>
    %14 = vector.broadcast %10 : vector<2x1xf32> to vector<2x768xf32>
    %15 = vector.broadcast %13 : vector<1x768xf32> to vector<2x768xf32>
    %16 = arith.mulf %14, %15 : vector<2x768xf32>
    %17 = arith.addf %6, %16 : vector<2x768xf32>
    %c1_i32 = arith.constant 1 : i32
    %18 = vector.broadcast %c1_i32 : i32 to vector<2x1xi32>
    %19 = arith.cmpi eq, %4, %18 : vector<2x1xi32>
    %20 = arith.extui %19 : vector<2x1xi1> to vector<2x1xi32>
    %21 = arith.sitofp %20 : vector<2x1xi32> to vector<2x1xf32>
    %22 = vector.extract_strided_slice %5 {offsets = [1, 0], sizes = [1, 768], strides = [1, 1]} : vector<4x768xf32> to vector<1x768xf32>
    %23 = vector.shape_cast %22 : vector<1x768xf32> to vector<768xf32>
    %24 = vector.shape_cast %23 : vector<768xf32> to vector<1x768xf32>
    %25 = vector.broadcast %21 : vector<2x1xf32> to vector<2x768xf32>
    %26 = vector.broadcast %24 : vector<1x768xf32> to vector<2x768xf32>
    %27 = arith.mulf %25, %26 : vector<2x768xf32>
    %28 = arith.addf %17, %27 : vector<2x768xf32>
    %c2_i32 = arith.constant 2 : i32
    %29 = vector.broadcast %c2_i32 : i32 to vector<2x1xi32>
    %30 = arith.cmpi eq, %4, %29 : vector<2x1xi32>
    %31 = arith.extui %30 : vector<2x1xi1> to vector<2x1xi32>
    %32 = arith.sitofp %31 : vector<2x1xi32> to vector<2x1xf32>
    %33 = vector.extract_strided_slice %5 {offsets = [2, 0], sizes = [1, 768], strides = [1, 1]} : vector<4x768xf32> to vector<1x768xf32>
    %34 = vector.shape_cast %33 : vector<1x768xf32> to vector<768xf32>
    %35 = vector.shape_cast %34 : vector<768xf32> to vector<1x768xf32>
    %36 = vector.broadcast %32 : vector<2x1xf32> to vector<2x768xf32>
    %37 = vector.broadcast %35 : vector<1x768xf32> to vector<2x768xf32>
    %38 = arith.mulf %36, %37 : vector<2x768xf32>
    %39 = arith.addf %28, %38 : vector<2x768xf32>
    %c3_i32_4 = arith.constant 3 : i32
    %40 = vector.broadcast %c3_i32_4 : i32 to vector<2x1xi32>
    %41 = arith.cmpi eq, %4, %40 : vector<2x1xi32>
    %42 = arith.extui %41 : vector<2x1xi1> to vector<2x1xi32>
    %43 = arith.sitofp %42 : vector<2x1xi32> to vector<2x1xf32>
    %44 = vector.extract_strided_slice %5 {offsets = [3, 0], sizes = [1, 768], strides = [1, 1]} : vector<4x768xf32> to vector<1x768xf32>
    %45 = vector.shape_cast %44 : vector<1x768xf32> to vector<768xf32>
    %46 = vector.shape_cast %45 : vector<768xf32> to vector<1x768xf32>
    %47 = vector.broadcast %43 : vector<2x1xf32> to vector<2x768xf32>
    %48 = vector.broadcast %46 : vector<1x768xf32> to vector<2x768xf32>
    %49 = arith.mulf %47, %48 : vector<2x768xf32>
    %50 = arith.addf %39, %49 : vector<2x768xf32>
    %c0_5 = arith.constant 0 : index
    %c0_6 = arith.constant 0 : index
    %51 = vector.load %arg2[%c0_5, %c0_6] : memref<2x768xf32, #tpu.memory_space<vmem>>, vector<2x768xf32>
    tpu.vector_store %arg2[%c0_5, %c0_6], %50 {strides = array<i32>} : memref<2x768xf32, #tpu.memory_space<vmem>>, vector<2x768xf32>,
    return
  }
}

</mosaic_0001>

<llo_original>
// kernel: tpu_custom_call.1
$region0: #{tpu_custom_call.1}
  #allocation0 [shape = 'u32[]', space=smem, size = 0x4, offset = 0x4, fixed_abs, tag = 'smem constant byte address 0x4 - core index']
  #allocation1 [shape = 'u32[72,128]{1,0:T(1,128)}', space=vmem, size = 0x9000, scoped, tag = 'internal scratch']
  %s0 = inlined_call_operand.vmem [shape: s32[2,1], index: 0, kind: input, shape index: {}]
  %s1 = inlined_call_operand.hbm [shape: f32[4,768], index: 1, kind: input, shape index: {}]
  %s2 = inlined_call_operand.hbm [shape: f32[2,768], index: 2, kind: output, shape index: {}]
  %s3 = sld [smem:[#allocation0]]
  $region22: #{tpu_custom_call.1} parent=0
    _
  %s5 = ssub.s32 1, %s3
  %s6 = scalar_select 0, %s5, %s3
  $region1: #{tpu_custom_call.1} parent=0
    #allocation2 [shape = 'u8[12288]{0}', space=vmem, size = 0x3000, scoped, tag = 'input window, operand 1, single buffered']
    #allocation3 [shape = 's32[1]{0}', space=sflag, size = 0x4, scoped, tag = 'scoped memory for tpu_custom_call.1']
    #allocation4 [shape = 's32[1]{0}', space=sflag, size = 0x4, scoped, tag = 'scoped memory for tpu_custom_call.1']
    #allocation5 [shape = 'u8[6144]{0}', space=vmem, size = 0x1800, scoped, tag = 'output window, operand 0, single buffered']
    %7 = vsyncpa [#allocation3], 0
    %8 = vsyncpa [#allocation4], 0
    // Predicated region
    $region2: #{tpu_custom_call.1} parent=1 // pred_check
      _
    $region3: #{tpu_custom_call.1} parent=1 // pred_check_branch
      %10 = sbr.rel (0) target = $region5
    $region4: #{tpu_custom_call.1} parent=1 // pred_region
      _
    $region5: #{tpu_custom_call.1} parent=1 // pred_fallthru
      _
    // Predicated region
    $region6: #{tpu_custom_call.1} parent=1 // pred_check
      _
    $region7: #{tpu_custom_call.1} parent=1 // pred_check_branch
      %12 = sbr.rel (0) target = $region9
    $region8: #{tpu_custom_call.1} parent=1 // pred_region
      %14 = vsyncadd [#allocation3], 0
      %s16 = sshll.u32 %s1, 4
      %s17 = int_to_ptr.hbm [resolvable:$true] %s16
      %s18 = sshll.u32 [#allocation2], 4
      %s19 = int_to_ptr.vmem [resolvable:$true] %s18
      %21 = dma.hbm_to_vmem [thread:$0]  %s17, 384, %s19, [#allocation3]
    $region9: #{tpu_custom_call.1} parent=1 // pred_fallthru
      _
    // Predicated region
    $region10: #{tpu_custom_call.1} parent=1 // pred_check
      _
    $region11: #{tpu_custom_call.1} parent=1 // pred_check_branch
      %23 = sbr.rel (0) target = $region13
    $region12: #{tpu_custom_call.1} parent=1 // pred_region
      %25 = dma.done [#allocation3], 384
    $region13: #{tpu_custom_call.1} parent=1 // pred_fallthru
      _
    %v26 = vld [vmem:[%s0] sm:$0x3]
    %vm27 = vcmp.gt.s32.totalorder %v26, 0
    %v28 = vsel %vm27, %v26, 0
    %vm29 = vcmp.lt.s32.totalorder %v28, 3
    %v30 = vsel %vm29, %v28, 3
    %v31 = vld [vmem:[#allocation2] sm:$0xff]
    %v32 = vld [vmem:[#allocation2 + $0x8] sm:$0xff]
    %v33 = vld [vmem:[#allocation2 + $0x10] sm:$0xff]
    %vm34 = vcmp.eq.s32.totalorder %v30, 0
    %v35 = vsel %vm34, 1, 0
    %v36 = vcvt.s32.f32 %v35
    %38 = vset.pattern.permute.xlu0 0
    %39 = vperm.xlu0 %38, %v36
    %v40 = vpop.permute.xlu0 %39
    %v45 = vperm.slane %v31, 0
    %v46 = vperm.slane %v31, 4
    %v47 = vperm.slane %v32, 0
    %v48 = vperm.slane %v32, 4
    %v49 = vperm.slane %v33, 0
    %v50 = vperm.slane %v33, 4
    %v57 = vperm.slane %v45, 0
    %v58 = vperm.slane %v46, 0
    %v59 = vperm.slane %v47, 0
    %v60 = vperm.slane %v48, 0
    %v61 = vperm.slane %v49, 0
    %v62 = vperm.slane %v50, 0
    %v63 = vmul.f32 %v40, %v57
    %v64 = vmul.f32 %v40, %v58
    %v65 = vmul.f32 %v40, %v59
    %v66 = vmul.f32 %v40, %v60
    %v67 = vmul.f32 %v40, %v61
    %v68 = vmul.f32 %v40, %v62
    %v69 = vadd.f32 %v63, 0.0
    %v70 = vadd.f32 %v64, 0.0
    %v71 = vadd.f32 %v65, 0.0
    %v72 = vadd.f32 %v66, 0.0
    %v73 = vadd.f32 %v67, 0.0
    %v74 = vadd.f32 %v68, 0.0
    %vm75 = vcmp.eq.s32.totalorder %v30, 1
    %v76 = vsel %vm75, 1, 0
    %v77 = vcvt.s32.f32 %v76
    %79 = vset.pattern.permute.xlu0 0
    %80 = vperm.xlu0 %79, %v77
    %v81 = vpop.permute.xlu0 %80
    %v83 = vperm.slane %v31, 1
    %v84 = vperm.slane %v31, 5
    %v85 = vperm.slane %v32, 1
    %v86 = vperm.slane %v32, 5
    %v87 = vperm.slane %v33, 1
    %v88 = vperm.slane %v33, 5
    %v95 = vperm.slane %v83, 1
    %v96 = vperm.slane %v84, 1
    %v97 = vperm.slane %v85, 1
    %v98 = vperm.slane %v86, 1
    %v99 = vperm.slane %v87, 1
    %v100 = vperm.slane %v88, 1
    %v101 = vmul.f32 %v81, %v95
    %v102 = vmul.f32 %v81, %v96
    %v103 = vmul.f32 %v81, %v97
    %v104 = vmul.f32 %v81, %v98
    %v105 = vmul.f32 %v81, %v99
    %v106 = vmul.f32 %v81, %v100
    %v107 = vadd.f32 %v69, %v101
    %v108 = vadd.f32 %v70, %v102
    %v109 = vadd.f32 %v71, %v103
    %v110 = vadd.f32 %v72, %v104
    %v111 = vadd.f32 %v73, %v105
    %v112 = vadd.f32 %v74, %v106
    %vm113 = vcmp.eq.s32.totalorder %v30, 2
    %v114 = vsel %vm113, 1, 0
    %v115 = vcvt.s32.f32 %v114
    %117 = vset.pattern.permute.xlu0 0
    %118 = vperm.xlu0 %117, %v115
    %v119 = vpop.permute.xlu0 %118
    %v121 = vperm.slane %v31, 2
    %v122 = vperm.slane %v31, 6
    %v123 = vperm.slane %v32, 2
    %v124 = vperm.slane %v32, 6
    %v125 = vperm.slane %v33, 2
    %v126 = vperm.slane %v33, 6
    %v133 = vperm.slane %v121, 2
    %v134 = vperm.slane %v122, 2
    %v135 = vperm.slane %v123, 2
    %v136 = vperm.slane %v124, 2
    %v137 = vperm.slane %v125, 2
    %v138 = vperm.slane %v126, 2
    %v139 = vmul.f32 %v119, %v133
    %v140 = vmul.f32 %v119, %v134
    %v141 = vmul.f32 %v119, %v135
    %v142 = vmul.f32 %v119, %v136
    %v143 = vmul.f32 %v119, %v137
    %v144 = vmul.f32 %v119, %v138
    %v145 = vadd.f32 %v107, %v139
    %v146 = vadd.f32 %v108, %v140
    %v147 = vadd.f32 %v109, %v141
    %v148 = vadd.f32 %v110, %v142
    %v149 = vadd.f32 %v111, %v143
    %v150 = vadd.f32 %v112, %v144
    %vm151 = vcmp.eq.s32.totalorder %v30, 3
    %v152 = vsel %vm151, 1, 0
    %v153 = vcvt.s32.f32 %v152
    %155 = vset.pattern.permute.xlu0 0
    %156 = vperm.xlu0 %155, %v153
    %v157 = vpop.permute.xlu0 %156
    %v159 = vperm.slane %v31, 3
    %v160 = vperm.slane %v31, 7
    %v161 = vperm.slane %v32, 3
    %v162 = vperm.slane %v32, 7
    %v163 = vperm.slane %v33, 3
    %v164 = vperm.slane %v33, 7
    %v171 = vperm.slane %v159, 3
    %v172 = vperm.slane %v160, 3
    %v173 = vperm.slane %v161, 3
    %v174 = vperm.slane %v162, 3
    %v175 = vperm.slane %v163, 3
    %v176 = vperm.slane %v164, 3
    %v177 = vmul.f32 %v157, %v171
    %v178 = vmul.f32 %v157, %v172
    %v179 = vmul.f32 %v157, %v173
    %v180 = vmul.f32 %v157, %v174
    %v181 = vmul.f32 %v157, %v175
    %v182 = vmul.f32 %v157, %v176
    %v183 = vadd.f32 %v145, %v177
    %v184 = vadd.f32 %v146, %v178
    %v185 = vadd.f32 %v147, %v179
    %v186 = vadd.f32 %v148, %v180
    %v187 = vadd.f32 %v149, %v181
    %v188 = vadd.f32 %v150, %v182
    %v195 = vrot.slane %v184, 6
    %v196 = vrot.slane %v185, 4
    %v197 = vrot.slane %v186, 2
    %v198 = vrot.slane %v188, 6
    %vm199 = vcmask 1041408
    %v200 = vsel %vm199, %v183, %v195
    %vm201 = vcmask 1045508
    %v202 = vsel %vm201, %v196, %v197
    %vm203 = vcmask 1043456
    %v204 = vsel %vm203, %v200, %v202
    %v205 = vsel %vm199, %v187, %v198
    %208 = vst [vmem:[#allocation5] sm:$0xff] %v204
    %209 = vst [vmem:[#allocation5 + $0x8] sm:$0xf] %v205
    // Predicated region
    $region14: #{tpu_custom_call.1} parent=1 // pred_check
      _
    $region15: #{tpu_custom_call.1} parent=1 // pred_check_branch
      %211 = sbr.rel (0) target = $region17
    $region16: #{tpu_custom_call.1} parent=1 // pred_region
      %213 = vsyncadd [#allocation4], 0
      %s215 = sshll.u32 [#allocation5], 4
      %s216 = int_to_ptr.vmem [resolvable:$true] %s215
      %s217 = sshll.u32 %s2, 4
      %s218 = int_to_ptr.hbm [resolvable:$true] %s217
      %220 = dma.vmem_to_hbm [thread:$0]  %s216, 192, %s218, [#allocation4]
    $region17: #{tpu_custom_call.1} parent=1 // pred_fallthru
      _
    // Predicated region
    $region18: #{tpu_custom_call.1} parent=1 // pred_check
      _
    $region19: #{tpu_custom_call.1} parent=1 // pred_check_branch
      %222 = sbr.rel (0) target = $region21
    $region20: #{tpu_custom_call.1} parent=1 // pred_region
      %224 = dma.done [#allocation4], 192
    $region21: #{tpu_custom_call.1} parent=1 // pred_fallthru
      _
    %225 = vsyncpa [#allocation3], 1
    %226 = vsyncpa [#allocation4], 1

</llo_original>
